<compile_context>
chip_gen: v7x
topology: tpu7x:2x2x1
jax: 0.10.0
libtpu: 0.0.40
codegen_flags: <defaults>
</compile_context>

<pallas_src>
import functools

import jax
import jax.numpy as jnp
import numpy as np
from jax import lax
from jax.experimental import pallas as pl
from jax.experimental.pallas import tpu as pltpu

HID1 = 32
HID2 = 64
_LANES = 128     # vreg lane width
_CHUNK = 256     # in-kernel lane sub-tile (keeps f32 h1/h2 in vregs)


def _round_up(x, m):
    return ((x + m - 1) // m) * m


def tree_predictor_kernel(xT_ref, w1_ref, b1_ref, w2_ref, b2_ref, w3_ref,
                          b3_ref, o_ref, *, chunk):
    """Fused 3-layer MLP, batch on the lane axis, sub-tiled over lane chunks.

    xT_ref : [in_size, Bt]    (bf16)
    wN_ref : [out_f, in_f]    (bf16, already transposed)
    bN_ref : [out_f, 1]       (f32)
    o_ref  : [out_size, Bt]   (f32)
    """
    # Hoist the (tiny) weights/biases once per grid step.
    w1 = w1_ref[...]
    b1 = b1_ref[...]
    w2 = w2_ref[...]
    b2 = b2_ref[...]
    w3 = w3_ref[...]
    b3 = b3_ref[...]

    n_chunks = xT_ref.shape[1] // chunk

    def body(c, carry):
        start = pl.multiple_of(c * chunk, chunk)
        xT = xT_ref[:, pl.ds(start, chunk)]                          # [in, ck]

        # fc1 + ReLU -> [32, ck]
        h1 = jnp.dot(w1, xT, preferred_element_type=jnp.float32)
        h1 = jnp.maximum(h1 + b1, 0.0).astype(xT.dtype)

        # fc2 + ReLU -> [64, ck]
        h2 = jnp.dot(w2, h1, preferred_element_type=jnp.float32)
        h2 = jnp.maximum(h2 + b2, 0.0).astype(xT.dtype)

        # fc3 + Sigmoid -> [out_size, ck]
        logits = jnp.dot(w3, h2, preferred_element_type=jnp.float32) + b3
        # exp -> EUP, approximate reciprocal -> EUP; keeps the VPU slot free.
        o_ref[:, pl.ds(start, chunk)] = pl.reciprocal(
            1.0 + jnp.exp(-logits), approx=True).astype(o_ref.dtype)
        return carry

    # unroll=True: LLO scheduler sees the whole chunk sequence; fori_loop (not
    # a Python for) bounds live ranges of the per-chunk intermediates.
    lax.fori_loop(0, n_chunks, body, 0, unroll=True)


def reference_forward(x, p, compute_dtype=jnp.bfloat16):
    """Pure-JAX reference mirroring the kernel's bf16 input rounding."""
    lo = lambda a: a.astype(compute_dtype).astype(jnp.float32)
    h1 = jnp.maximum(lo(x) @ lo(p["w1"]) + p["b1"], 0.0)
    h2 = jnp.maximum(lo(h1) @ lo(p["w2"]) + p["b2"], 0.0)
    return jax.nn.sigmoid(lo(h2) @ lo(p["w3"]) + p["b3"])


def tree_predictor_forward(x, params, *, block_batch=8192,
                           compute_dtype=jnp.bfloat16,
                           min_pallas_batch=1024,
                           batch_major_output=True):
    """Fused MLP forward.  x: [B, input_size] f32.

    Returns [B, out_size] f32 (or [out_size, B] if batch_major_output=False).
    params: w1 [in,32], b1 [1,32]/[32], w2 [32,64], b2, w3 [64,out], b3.
    """
    B, in_size = x.shape
    out_size = params["w3"].shape[1]

    # Small-batch fallback: pad-to-128 + kernel launch overhead would exceed
    # the cost of three tiny XLA dots.
    if B < min_pallas_batch:
        out = reference_forward(x, params, compute_dtype)
        return out if batch_major_output else jnp.transpose(out)

    # ---- tile selection -----------------------------------------------------
    B_ceil = _round_up(B, _LANES)
    block_batch = min(block_batch, B_ceil)
    block_batch = max(_LANES, (block_batch // _LANES) * _LANES)
    # v7x megacore: keep >=2 grid steps when the batch allows it so both
    # TensorCores get work under dimension_semantics=("parallel",).
    if (B_ceil + block_batch - 1) // block_batch < 2 and block_batch > _LANES:
        block_batch = max(_LANES, _round_up(block_batch // 2, _LANES))
    chunk = next(c for c in (_CHUNK, _LANES) if block_batch % c == 0)
    B_pad = _round_up(B, block_batch)
    grid = (B_pad // block_batch,)

    # ---- wrapper-side layout plumbing (cheap XLA ops) -------------------------
    xT = jnp.transpose(x.astype(compute_dtype))                 # [in, B] bf16
    if B_pad != B:
        xT = jnp.pad(xT, ((0, 0), (0, B_pad - B)))

    w1T = jnp.transpose(params["w1"]).astype(compute_dtype)     # [32, in]
    w2T = jnp.transpose(params["w2"]).astype(compute_dtype)     # [64, 32]
    w3T = jnp.transpose(params["w3"]).astype(compute_dtype)     # [out, 64]

    b1 = jnp.asarray(params["b1"], jnp.float32).reshape(-1, 1)  # [32, 1]
    b2 = jnp.asarray(params["b2"], jnp.float32).reshape(-1, 1)  # [64, 1]
    b3 = jnp.asarray(params["b3"], jnp.float32).reshape(-1, 1)  # [out, 1]

    # Explicit scoped-VMEM limit sized from the actual per-step footprint
    # (double-buffered xT/out blocks + replicated weights + live f32 temps),
    # with generous headroom; stays well under v7x's 64 MiB physical VMEM.
    per_step_bytes = (
        2 * in_size * block_batch * 2            # xT double buffer (bf16)
        + 2 * out_size * block_batch * 4         # out double buffer (f32)
        + 2 * 2 * (w1T.size + w2T.size + w3T.size)
        + 2 * 4 * (b1.size + b2.size + b3.size)
        + 2 * 4 * (HID1 + HID2 + out_size) * chunk)
    vmem_limit_bytes = int(min(100 << 20, max(16 << 20, 4 * per_step_bytes)))

    def rep(arr):  # tiny weight/bias: constant index map (fetched once)
        return pl.BlockSpec(arr.shape, lambda i, _nd=arr.ndim: (0,) * _nd)

    kernel = functools.partial(tree_predictor_kernel, chunk=chunk)

    out = pl.pallas_call(
        kernel,
        out_shape=jax.ShapeDtypeStruct((out_size, B_pad), jnp.float32),
        grid_spec=pltpu.PrefetchScalarGridSpec(
            num_scalar_prefetch=0,
            grid=grid,
            in_specs=[
                pl.BlockSpec((in_size, block_batch), lambda i: (0, i)),  # xT
                rep(w1T), rep(b1), rep(w2T), rep(b2), rep(w3T), rep(b3),
            ],
            out_specs=pl.BlockSpec((out_size, block_batch), lambda i: (0, i)),
        ),
        compiler_params=pltpu.CompilerParams(
            dimension_semantics=("parallel",),
            vmem_limit_bytes=vmem_limit_bytes),
    )(xT, w1T, b1, w2T, b2, w3T, b3)

    out = out[:, :B]                       # drop padded batch columns
    return jnp.transpose(out) if batch_major_output else out


def init_params(key, input_size, output_size):
    """Deterministic init mimicking PyTorch Linear (uniform +/- 1/sqrt(fan_in))."""
    ks = jax.random.split(key, 6)

    def linear(kw, kb, fan_in, fan_out):
        bound = 1.0 / np.sqrt(fan_in)
        w = jax.random.uniform(kw, (fan_in, fan_out), jnp.float32, -bound, bound)
        b = jax.random.uniform(kb, (1, fan_out), jnp.float32, -bound, bound)
        return w, b

    w1, b1 = linear(ks[0], ks[1], input_size, HID1)
    w2, b2 = linear(ks[2], ks[3], HID1, HID2)
    w3, b3 = linear(ks[4], ks[5], HID2, output_size)
    return {"w1": w1, "b1": b1, "w2": w2, "b2": b2, "w3": w3, "b3": b3}


if __name__ == "__main__":
    key = jax.random.PRNGKey(0)
    k_x, k_p, k_x2, k_x3 = jax.random.split(key, 4)

    input_size = 4     # number of (standard-scaled) tree features
    output_size = 6    # number of species classes
    params = init_params(k_p, input_size, output_size)

    # 1) Tiny batch -> small-batch fallback path (plain JAX, per perf review).
    x_small = jax.random.normal(k_x, (8, input_size), dtype=jnp.float32)
    out_small = jax.block_until_ready(tree_predictor_forward(x_small, params))
    np.testing.assert_allclose(np.asarray(out_small),
                               np.asarray(reference_forward(x_small, params)),
                               rtol=1e-2, atol=1e-2)

    # 2) Force the Pallas path on a non-divisible batch: exercises padding,
    #    a 2-step grid, and the unpadded [out_size, B] output block.
    x_med = jax.random.normal(k_x2, (300, input_size), dtype=jnp.float32)
    out_med = jax.block_until_ready(
        tree_predictor_forward(x_med, params, block_batch=256,
                               min_pallas_batch=0))
    np.testing.assert_allclose(np.asarray(out_med),
                               np.asarray(reference_forward(x_med, params)),
                               rtol=1e-2, atol=1e-2)

    # 3) Default settings above the fallback threshold: exercises the in-kernel
    #    lane sub-tiling loop (multiple 256-column chunks) and the >=2-step grid.
    x_big = jax.random.normal(k_x3, (4096, input_size), dtype=jnp.float32)
    out_big = jax.block_until_ready(tree_predictor_forward(x_big, params))
    np.testing.assert_allclose(np.asarray(out_big),
                               np.asarray(reference_forward(x_big, params)),
                               rtol=1e-2, atol=1e-2)

    print("KERNEL_OK")
</pallas_src>

<mosaic_0001>
module attributes {stable_mosaic.version = 11 : i64} {
  func.func @tree_predictor_kernel(%arg0: i32, %arg1: memref<4x256xbf16, #tpu.memory_space<vmem>>, %arg2: memref<32x4xbf16, #tpu.memory_space<vmem>>, %arg3: memref<32x1xf32, #tpu.memory_space<vmem>>, %arg4: memref<64x32xbf16, #tpu.memory_space<vmem>>, %arg5: memref<64x1xf32, #tpu.memory_space<vmem>>, %arg6: memref<6x64xbf16, #tpu.memory_space<vmem>>, %arg7: memref<6x1xf32, #tpu.memory_space<vmem>>, %arg8: memref<6x256xf32, #tpu.memory_space<vmem>>) attributes {dimension_semantics = [#tpu.dimension_semantics<parallel>], iteration_bounds = array<i64: 2>, scalar_prefetch = 0 : i64, scratch_operands = 0 : i64, tpu.core_type = #tpu.core_type<tc>, window_params = [{transform_indices = @transform_0, window_bounds = array<i64: 4, 256>}, {pipeline_mode = #tpu.pipeline_mode<synchronous>, transform_indices = @transform_1, window_bounds = array<i64: 32, 4>}, {pipeline_mode = #tpu.pipeline_mode<synchronous>, transform_indices = @transform_2, window_bounds = array<i64: 32, 1>}, {pipeline_mode = #tpu.pipeline_mode<synchronous>, transform_indices = @transform_3, window_bounds = array<i64: 64, 32>}, {pipeline_mode = #tpu.pipeline_mode<synchronous>, transform_indices = @transform_4, window_bounds = array<i64: 64, 1>}, {pipeline_mode = #tpu.pipeline_mode<synchronous>, transform_indices = @transform_5, window_bounds = array<i64: 6, 64>}, {pipeline_mode = #tpu.pipeline_mode<synchronous>, transform_indices = @transform_6, window_bounds = array<i64: 6, 1>}, {transform_indices = @transform_7, window_bounds = array<i64: 6, 256>}]} {
    %c0 = arith.constant 0 : index
    %c0_0 = arith.constant 0 : index
    %0 = vector.load %arg2[%c0, %c0_0] : memref<32x4xbf16, #tpu.memory_space<vmem>>, vector<32x4xbf16>
    %c0_1 = arith.constant 0 : index
    %c0_2 = arith.constant 0 : index
    %1 = vector.load %arg3[%c0_1, %c0_2] : memref<32x1xf32, #tpu.memory_space<vmem>>, vector<32x1xf32>
    %c0_3 = arith.constant 0 : index
    %c0_4 = arith.constant 0 : index
    %2 = vector.load %arg4[%c0_3, %c0_4] : memref<64x32xbf16, #tpu.memory_space<vmem>>, vector<64x32xbf16>
    %c0_5 = arith.constant 0 : index
    %c0_6 = arith.constant 0 : index
    %3 = vector.load %arg5[%c0_5, %c0_6] : memref<64x1xf32, #tpu.memory_space<vmem>>, vector<64x1xf32>
    %c0_7 = arith.constant 0 : index
    %c0_8 = arith.constant 0 : index
    %4 = vector.load %arg6[%c0_7, %c0_8] : memref<6x64xbf16, #tpu.memory_space<vmem>>, vector<6x64xbf16>
    %c0_9 = arith.constant 0 : index
    %c0_10 = arith.constant 0 : index
    %5 = vector.load %arg7[%c0_9, %c0_10] : memref<6x1xf32, #tpu.memory_space<vmem>>, vector<6x1xf32>
    %c0_i32 = arith.constant 0 : i32
    %c256_i32 = arith.constant 256 : i32
    %6 = arith.muli %c0_i32, %c256_i32 : i32
    %7 = tpu.assume_multiple %6, 256 : i32
    %c0_11 = arith.constant 0 : index
    %8 = arith.index_cast %7 : i32 to index
    %9 = vector.load %arg1[%c0_11, %8] : memref<4x256xbf16, #tpu.memory_space<vmem>>, vector<4x256xbf16>
    %cst = arith.constant dense<0.000000e+00> : vector<32x256xf32>
    %10 = tpu.matmul %0, %9, %cst {dimension_numbers = #tpu.dot_dimension_numbers<[1], [0], [0], [1], [0, 0, 1, 1], [], []>} : vector<32x4xbf16>, vector<4x256xbf16>, vector<32x256xf32> -> vector<32x256xf32>
    %11 = vector.broadcast %1 : vector<32x1xf32> to vector<32x256xf32>
    %12 = arith.addf %10, %11 : vector<32x256xf32>
    %cst_12 = arith.constant 0.000000e+00 : f32
    %13 = vector.broadcast %cst_12 : f32 to vector<32x256xf32>
    %14 = arith.maximumf %12, %13 : vector<32x256xf32>
    %15 = arith.truncf %14 : vector<32x256xf32> to vector<32x256xbf16>
    %cst_13 = arith.constant dense<0.000000e+00> : vector<64x256xf32>
    %16 = tpu.matmul %2, %15, %cst_13 {dimension_numbers = #tpu.dot_dimension_numbers<[1], [0], [0], [1], [0, 0, 1, 1], [], []>} : vector<64x32xbf16>, vector<32x256xbf16>, vector<64x256xf32> -> vector<64x256xf32>
    %17 = vector.broadcast %3 : vector<64x1xf32> to vector<64x256xf32>
    %18 = arith.addf %16, %17 : vector<64x256xf32>
    %cst_14 = arith.constant 0.000000e+00 : f32
    %19 = vector.broadcast %cst_14 : f32 to vector<64x256xf32>
    %20 = arith.maximumf %18, %19 : vector<64x256xf32>
    %21 = arith.truncf %20 : vector<64x256xf32> to vector<64x256xbf16>
    %cst_15 = arith.constant dense<0.000000e+00> : vector<6x256xf32>
    %22 = tpu.matmul %4, %21, %cst_15 {dimension_numbers = #tpu.dot_dimension_numbers<[1], [0], [0], [1], [0, 0, 1, 1], [], []>} : vector<6x64xbf16>, vector<64x256xbf16>, vector<6x256xf32> -> vector<6x256xf32>
    %23 = vector.broadcast %5 : vector<6x1xf32> to vector<6x256xf32>
    %24 = arith.addf %22, %23 : vector<6x256xf32>
    %cst_16 = arith.constant 0.000000e+00 : f32
    %25 = vector.broadcast %cst_16 : f32 to vector<6x256xf32>
    %26 = arith.subf %25, %24 : vector<6x256xf32>
    %27 = math.exp %26 : vector<6x256xf32>
    %cst_17 = arith.constant 1.000000e+00 : f32
    %28 = vector.broadcast %cst_17 : f32 to vector<6x256xf32>
    %29 = arith.addf %28, %27 : vector<6x256xf32>
    %30 = tpu.reciprocal %29 {approx = true} : vector<6x256xf32> -> vector<6x256xf32>
    %c0_18 = arith.constant 0 : index
    %31 = arith.index_cast %7 : i32 to index
    %32 = vector.load %arg8[%c0_18, %31] : memref<6x256xf32, #tpu.memory_space<vmem>>, vector<6x256xf32>
    tpu.vector_store %arg8[%c0_18, %31], %30 {strides = array<i32>} : memref<6x256xf32, #tpu.memory_space<vmem>>, vector<6x256xf32>,
    %c1_i32 = arith.constant 1 : i32
    return
  }
  func.func @transform_0(%arg0: i32) -> (i32, i32) {
    %c0_i32 = arith.constant 0 : i32
    %c0_i32_0 = arith.constant 0 : i32
    return %c0_i32, %arg0 : i32, i32
  }
  func.func @transform_1(%arg0: i32) -> (i32, i32) {
    %c0_i32 = arith.constant 0 : i32
    %c0_i32_0 = arith.constant 0 : i32
    %c0_i32_1 = arith.constant 0 : i32
    return %c0_i32, %c0_i32_0 : i32, i32
  }
  func.func @transform_2(%arg0: i32) -> (i32, i32) {
    %c0_i32 = arith.constant 0 : i32
    %c0_i32_0 = arith.constant 0 : i32
    %c0_i32_1 = arith.constant 0 : i32
    return %c0_i32, %c0_i32_0 : i32, i32
  }
  func.func @transform_3(%arg0: i32) -> (i32, i32) {
    %c0_i32 = arith.constant 0 : i32
    %c0_i32_0 = arith.constant 0 : i32
    %c0_i32_1 = arith.constant 0 : i32
    return %c0_i32, %c0_i32_0 : i32, i32
  }
  func.func @transform_4(%arg0: i32) -> (i32, i32) {
    %c0_i32 = arith.constant 0 : i32
    %c0_i32_0 = arith.constant 0 : i32
    %c0_i32_1 = arith.constant 0 : i32
    return %c0_i32, %c0_i32_0 : i32, i32
  }
  func.func @transform_5(%arg0: i32) -> (i32, i32) {
    %c0_i32 = arith.constant 0 : i32
    %c0_i32_0 = arith.constant 0 : i32
    %c0_i32_1 = arith.constant 0 : i32
    return %c0_i32, %c0_i32_0 : i32, i32
  }
  func.func @transform_6(%arg0: i32) -> (i32, i32) {
    %c0_i32 = arith.constant 0 : i32
    %c0_i32_0 = arith.constant 0 : i32
    %c0_i32_1 = arith.constant 0 : i32
    return %c0_i32, %c0_i32_0 : i32, i32
  }
  func.func @transform_7(%arg0: i32) -> (i32, i32) {
    %c0_i32 = arith.constant 0 : i32
    %c0_i32_0 = arith.constant 0 : i32
    return %c0_i32, %arg0 : i32, i32
  }
}

</mosaic_0001>

<llo_original>
// kernel: tpu_custom_call.1
$region0: #{tpu_custom_call.1}
  #allocation0 [shape = 'u32[]', space=smem, size = 0x4, offset = 0x4, fixed_abs, tag = 'smem constant byte address 0x4 - core index']
  #allocation1 [shape = 'u32[144,128]{1,0:T(1,128)}', space=vmem, size = 0x12000, scoped, tag = 'internal scratch']
  %s0 = inlined_call_operand.vmem [shape: bf16[4,512], index: 0, kind: input, shape index: {}]
  %s1 = inlined_call_operand.vmem [shape: bf16[32,4], index: 1, kind: input, shape index: {}]
  %s2 = inlined_call_operand.vmem [shape: f32[32,1], index: 2, kind: input, shape index: {}]
  %s3 = inlined_call_operand.vmem [shape: bf16[64,32], index: 3, kind: input, shape index: {}]
  %s4 = inlined_call_operand.vmem [shape: f32[64,1], index: 4, kind: input, shape index: {}]
  %s5 = inlined_call_operand.vmem [shape: bf16[6,64], index: 5, kind: input, shape index: {}]
  %s6 = inlined_call_operand.vmem [shape: f32[6,1], index: 6, kind: input, shape index: {}]
  %s7 = inlined_call_operand.hbm [shape: f32[6,512], index: 7, kind: output, shape index: {}]
  %s8 = sld [smem:[#allocation0]]
  $region61: #{tpu_custom_call.1} parent=0
    _
  %s10 = ssub.s32 1, %s8
  %s11 = scalar_select 0, %s10, %s8
  $region1: #{tpu_custom_call.1} parent=0
    #allocation2 [shape = 'u8[16384]{0}', space=vmem, size = 0x4000, scoped, tag = 'output window, operand 0']
    #allocation3 [shape = 's32[2]{0}', space=sflag, size = 0x8, scoped, tag = 'scoped memory for tpu_custom_call.1']
    %12 = vsyncpa [#allocation3], 0
    %s13 = scalar_lea.sflag [#allocation3], 1
    %14 = vsyncpa %s13, 0
    loop: start=0, step=1, limit=4
    $region2: #{tpu_custom_call.1} parent=1 // loop_pre_header
      _
    $region3: #{tpu_custom_call.1} parent=1 // loop_header
      %s16 = sphi 0, %s20
      %p17 = scmp.ge.s32.totalorder %s16, 4
      %s26 = sphi 0, %s28
      %s29 = sphi 0, %s26
      %s30 = sphi 0, %s29
      %s46 = sphi 0, %s30
      %s50 = sphi 0, %s50
      %s52 = sphi 0, %s50
      %s53 = sphi 0, %s52
      %s67 = sphi 0, %s53
      %s71 = sphi 0, %s71
      %s73 = sphi 0, %s71
      %s74 = sphi 0, %s73
      %s88 = sphi 0, %s74
      %s92 = sphi 0, %s92
      %s94 = sphi 0, %s92
      %s95 = sphi 0, %s94
      %s109 = sphi 0, %s95
      %s113 = sphi 0, %s113
      %s115 = sphi 0, %s113
      %s116 = sphi 0, %s115
      %s130 = sphi 0, %s116
      %s134 = sphi 0, %s134
      %s136 = sphi 0, %s134
      %s137 = sphi 0, %s136
      %s151 = sphi 0, %s137
      %s155 = sphi 0, %s155
      %s157 = sphi 0, %s155
      %s158 = sphi 0, %s157
      %s172 = sphi 0, %s158
      %s178 = sphi 0, %s180
      %s181 = sphi 0, %s178
      %s182 = sphi 0, %s181
      %s198 = sphi 0, %s182
    $region4: #{tpu_custom_call.1} parent=1 // loop_header_branch
      %19 = sbr.rel (%p17) target = $region8
    $region5: #{tpu_custom_call.1} parent=1 // loop_body
      %s21 = ssub.s32 %s16, 1
      %s22 = ssub.s32 %s16, 2
      %s23 = sadd.s32 %s16, 1
      %s24 = ssub.s32 %s16, %s23
      %p25 = scmp.eq.s32.totalorder %s24, 0
      %s27 = sadd.s32 %s26, 1
      %s28 = scalar_select %p25, %s26, %s27
      %p31 = pneg %p25
      %p32 = scmp.eq.s32.totalorder %s16, 1
      %p33 = por %p31, %p32
      %p34 = scmp.ne.s32.totalorder %s26, %s29
      %p35 = scmp.eq.s32.totalorder %s16, 0
      %p36 = por %p34, %p35
      %p37 = scmp.ne.s32.totalorder %s26, %s29
      %p38 = scmp.eq.s32.totalorder %s21, 1
      %p39 = por %p37, %p38
      %p40 = scmp.ne.s32.totalorder %s29, %s30
      %p41 = scmp.eq.s32.totalorder %s21, 0
      %p42 = por %p40, %p41
      %p43 = scmp.ne.s32.totalorder %s29, %s30
      %p44 = scmp.eq.s32.totalorder %s22, 1
      %p45 = por %p43, %p44
      %p47 = scmp.ne.s32.totalorder %s30, %s46
      %p48 = scmp.eq.s32.totalorder %s22, 0
      %p49 = por %p47, %p48
      %s51 = sadd.s32 %s50, 1
      %p54 = scmp.eq.s32.totalorder %s16, 1
      %p55 = scmp.ne.s32.totalorder %s50, %s52
      %p56 = scmp.eq.s32.totalorder %s16, 0
      %p57 = por %p55, %p56
      %p58 = scmp.ne.s32.totalorder %s50, %s52
      %p59 = scmp.eq.s32.totalorder %s21, 1
      %p60 = por %p58, %p59
      %p61 = scmp.ne.s32.totalorder %s52, %s53
      %p62 = scmp.eq.s32.totalorder %s21, 0
      %p63 = por %p61, %p62
      %p64 = scmp.ne.s32.totalorder %s52, %s53
      %p65 = scmp.eq.s32.totalorder %s22, 1
      %p66 = por %p64, %p65
      %p68 = scmp.ne.s32.totalorder %s53, %s67
      %p69 = scmp.eq.s32.totalorder %s22, 0
      %p70 = por %p68, %p69
      %s72 = sadd.s32 %s71, 1
      %p75 = scmp.eq.s32.totalorder %s16, 1
      %p76 = scmp.ne.s32.totalorder %s71, %s73
      %p77 = scmp.eq.s32.totalorder %s16, 0
      %p78 = por %p76, %p77
      %p79 = scmp.ne.s32.totalorder %s71, %s73
      %p80 = scmp.eq.s32.totalorder %s21, 1
      %p81 = por %p79, %p80
      %p82 = scmp.ne.s32.totalorder %s73, %s74
      %p83 = scmp.eq.s32.totalorder %s21, 0
      %p84 = por %p82, %p83
      %p85 = scmp.ne.s32.totalorder %s73, %s74
      %p86 = scmp.eq.s32.totalorder %s22, 1
      %p87 = por %p85, %p86
      %p89 = scmp.ne.s32.totalorder %s74, %s88
      %p90 = scmp.eq.s32.totalorder %s22, 0
      %p91 = por %p89, %p90
      %s93 = sadd.s32 %s92, 1
      %p96 = scmp.eq.s32.totalorder %s16, 1
      %p97 = scmp.ne.s32.totalorder %s92, %s94
      %p98 = scmp.eq.s32.totalorder %s16, 0
      %p99 = por %p97, %p98
      %p100 = scmp.ne.s32.totalorder %s92, %s94
      %p101 = scmp.eq.s32.totalorder %s21, 1
      %p102 = por %p100, %p101
      %p103 = scmp.ne.s32.totalorder %s94, %s95
      %p104 = scmp.eq.s32.totalorder %s21, 0
      %p105 = por %p103, %p104
      %p106 = scmp.ne.s32.totalorder %s94, %s95
      %p107 = scmp.eq.s32.totalorder %s22, 1
      %p108 = por %p106, %p107
      %p110 = scmp.ne.s32.totalorder %s95, %s109
      %p111 = scmp.eq.s32.totalorder %s22, 0
      %p112 = por %p110, %p111
      %s114 = sadd.s32 %s113, 1
      %p117 = scmp.eq.s32.totalorder %s16, 1
      %p118 = scmp.ne.s32.totalorder %s113, %s115
      %p119 = scmp.eq.s32.totalorder %s16, 0
      %p120 = por %p118, %p119
      %p121 = scmp.ne.s32.totalorder %s113, %s115
      %p122 = scmp.eq.s32.totalorder %s21, 1
      %p123 = por %p121, %p122
      %p124 = scmp.ne.s32.totalorder %s115, %s116
      %p125 = scmp.eq.s32.totalorder %s21, 0
      %p126 = por %p124, %p125
      %p127 = scmp.ne.s32.totalorder %s115, %s116
      %p128 = scmp.eq.s32.totalorder %s22, 1
      %p129 = por %p127, %p128
      %p131 = scmp.ne.s32.totalorder %s116, %s130
      %p132 = scmp.eq.s32.totalorder %s22, 0
      %p133 = por %p131, %p132
      %s135 = sadd.s32 %s134, 1
      %p138 = scmp.eq.s32.totalorder %s16, 1
      %p139 = scmp.ne.s32.totalorder %s134, %s136
      %p140 = scmp.eq.s32.totalorder %s16, 0
      %p141 = por %p139, %p140
      %p142 = scmp.ne.s32.totalorder %s134, %s136
      %p143 = scmp.eq.s32.totalorder %s21, 1
      %p144 = por %p142, %p143
      %p145 = scmp.ne.s32.totalorder %s136, %s137
      %p146 = scmp.eq.s32.totalorder %s21, 0
      %p147 = por %p145, %p146
      %p148 = scmp.ne.s32.totalorder %s136, %s137
      %p149 = scmp.eq.s32.totalorder %s22, 1
      %p150 = por %p148, %p149
      %p152 = scmp.ne.s32.totalorder %s137, %s151
      %p153 = scmp.eq.s32.totalorder %s22, 0
      %p154 = por %p152, %p153
      %s156 = sadd.s32 %s155, 1
      %p159 = scmp.eq.s32.totalorder %s16, 1
      %p160 = scmp.ne.s32.totalorder %s155, %s157
      %p161 = scmp.eq.s32.totalorder %s16, 0
      %p162 = por %p160, %p161
      %p163 = scmp.ne.s32.totalorder %s155, %s157
      %p164 = scmp.eq.s32.totalorder %s21, 1
      %p165 = por %p163, %p164
      %p166 = scmp.ne.s32.totalorder %s157, %s158
      %p167 = scmp.eq.s32.totalorder %s21, 0
      %p168 = por %p166, %p167
      %p169 = scmp.ne.s32.totalorder %s157, %s158
      %p170 = scmp.eq.s32.totalorder %s22, 1
      %p171 = por %p169, %p170
      %p173 = scmp.ne.s32.totalorder %s158, %s172
      %p174 = scmp.eq.s32.totalorder %s22, 0
      %p175 = por %p173, %p174
      %s176 = ssub.s32 %s16, %s23
      %p177 = scmp.eq.s32.totalorder %s176, 0
      %s179 = sadd.s32 %s178, 1
      %s180 = scalar_select %p177, %s178, %s179
      %p183 = pneg %p177
      %p184 = scmp.eq.s32.totalorder %s16, 1
      %p185 = por %p183, %p184
      %p186 = scmp.ne.s32.totalorder %s178, %s181
      %p187 = scmp.eq.s32.totalorder %s16, 0
      %p188 = por %p186, %p187
      %p189 = scmp.ne.s32.totalorder %s178, %s181
      %p190 = scmp.eq.s32.totalorder %s21, 1
      %p191 = por %p189, %p190
      %p192 = scmp.ne.s32.totalorder %s181, %s182
      %p193 = scmp.eq.s32.totalorder %s21, 0
      %p194 = por %p192, %p193
      %p195 = scmp.ne.s32.totalorder %s181, %s182
      %p196 = scmp.eq.s32.totalorder %s22, 1
      %p197 = por %p195, %p196
      %p199 = scmp.ne.s32.totalorder %s182, %s198
      %p200 = scmp.eq.s32.totalorder %s22, 0
      %p201 = por %p199, %p200
      %p202 = scmp.le.s32.totalorder 1, %s16
      %p203 = scmp.lt.s32.totalorder %s16, 3
      %p204 = pnand %p202, %p203
      %p205 = pneg %p204
      // Predicated region
      $region9: #{tpu_custom_call.1} parent=5 // pred_check
        _
      $region10: #{tpu_custom_call.1} parent=5 // pred_check_branch
        %207 = sbr.rel (%p204) target = $region12
      $region11: #{tpu_custom_call.1} parent=5 // pred_region
        %s208 = ssub.s32 %s16, 1
        // Predicated region
        $region13: #{tpu_custom_call.1} parent=11 // pred_check
          %p209 = pneg %p63
        $region14: #{tpu_custom_call.1} parent=11 // pred_check_branch
          %211 = sbr.rel (%p209) target = $region16
        $region15: #{tpu_custom_call.1} parent=11 // pred_region
          _
        $region16: #{tpu_custom_call.1} parent=11 // pred_fallthru
          _
        // Predicated region
        $region17: #{tpu_custom_call.1} parent=11 // pred_check
          %p212 = pneg %p84
        $region18: #{tpu_custom_call.1} parent=11 // pred_check_branch
          %214 = sbr.rel (%p212) target = $region20
        $region19: #{tpu_custom_call.1} parent=11 // pred_region
          _
        $region20: #{tpu_custom_call.1} parent=11 // pred_fallthru
          _
        // Predicated region
        $region21: #{tpu_custom_call.1} parent=11 // pred_check
          %p215 = pneg %p105
        $region22: #{tpu_custom_call.1} parent=11 // pred_check_branch
          %217 = sbr.rel (%p215) target = $region24
        $region23: #{tpu_custom_call.1} parent=11 // pred_region
          _
        $region24: #{tpu_custom_call.1} parent=11 // pred_fallthru
          _
        // Predicated region
        $region25: #{tpu_custom_call.1} parent=11 // pred_check
          %p218 = pneg %p126
        $region26: #{tpu_custom_call.1} parent=11 // pred_check_branch
          %220 = sbr.rel (%p218) target = $region28
        $region27: #{tpu_custom_call.1} parent=11 // pred_region
          _
        $region28: #{tpu_custom_call.1} parent=11 // pred_fallthru
          _
        // Predicated region
        $region29: #{tpu_custom_call.1} parent=11 // pred_check
          %p221 = pneg %p147
        $region30: #{tpu_custom_call.1} parent=11 // pred_check_branch
          %223 = sbr.rel (%p221) target = $region32
        $region31: #{tpu_custom_call.1} parent=11 // pred_region
          _
        $region32: #{tpu_custom_call.1} parent=11 // pred_fallthru
          _
        // Predicated region
        $region33: #{tpu_custom_call.1} parent=11 // pred_check
          %p224 = pneg %p168
        $region34: #{tpu_custom_call.1} parent=11 // pred_check_branch
          %226 = sbr.rel (%p224) target = $region36
        $region35: #{tpu_custom_call.1} parent=11 // pred_region
          _
        $region36: #{tpu_custom_call.1} parent=11 // pred_fallthru
          _
      $region12: #{tpu_custom_call.1} parent=5 // pred_fallthru
        _
      %p227 = scmp.lt.s32.totalorder %s16, 2
      // Predicated region
      $region37: #{tpu_custom_call.1} parent=5 // pred_check
        %p228 = pneg %p227
      $region38: #{tpu_custom_call.1} parent=5 // pred_check_branch
        %230 = sbr.rel (%p228) target = $region40
      $region39: #{tpu_custom_call.1} parent=5 // pred_region
        // Predicated region
        $region41: #{tpu_custom_call.1} parent=39 // pred_check
          %p231 = pneg %p36
        $region42: #{tpu_custom_call.1} parent=39 // pred_check_branch
          %233 = sbr.rel (%p231) target = $region44
        $region43: #{tpu_custom_call.1} parent=39 // pred_region
          %s234 = smul.u32 2, %s16
          %p235 = scmp.lt.s32.totalorder %s234, 3
          %s236 = scalar_select %p235, %s234, 3
          %s237 = smul.addr %s236, 2
          %s238 = scalar_lea.vmem %s0, %s237
          %s239 = smul.u32 2, %s16
        $region44: #{tpu_custom_call.1} parent=39 // pred_fallthru
          _
      $region40: #{tpu_custom_call.1} parent=5 // pred_fallthru
        _
      %p240 = scmp.le.s32.totalorder 1, %s16
      %p241 = scmp.lt.s32.totalorder %s16, 3
      %p242 = pnand %p240, %p241
      %p243 = pneg %p242
      // Predicated region
      $region45: #{tpu_custom_call.1} parent=5 // pred_check
        _
      $region46: #{tpu_custom_call.1} parent=5 // pred_check_branch
        %245 = sbr.rel (%p242) target = $region48
      $region47: #{tpu_custom_call.1} parent=5 // pred_region
        %s246 = ssub.s32 %s16, 1
        %s247 = smul.u32 2, %s21
        %p248 = scmp.lt.s32.totalorder %s247, 3
        %s249 = scalar_select %p248, %s247, 3
        %s250 = smul.addr %s249, 2
        %s251 = scalar_lea.vmem %s0, %s250
        %p252 = pneg %p42
        %p253 = pneg %p39
        %p254 = pneg %p63
        %p255 = pneg %p60
        %p256 = pneg %p84
        %p257 = pneg %p81
        %p258 = pneg %p105
        %p259 = pneg %p102
        %p260 = pneg %p126
        %p261 = pneg %p123
        %p262 = pneg %p147
        %p263 = pneg %p144
        %p264 = pneg %p168
        %p265 = pneg %p165
        %p266 = pneg %p194
        %p267 = pneg %p191
        %s268 = sand.u32 %s181, 1
        %s269 = scalar_lea.sflag [#allocation3], %s268
        %s270 = sand.u32 %s181, 1
        %s271 = smul.addr %s270, 16
        %s272 = scalar_lea.vmem [#allocation2], %s271
        %s273 = smul.u32 2, %s21
        %p274 = scmp.lt.s32.totalorder %s273, 3
        %s275 = scalar_select %p274, %s273, 3
        %s276 = smul.addr %s275, 2
        %s277 = scalar_lea.vmem %s0, %s276
        %s278 = smul.u32 2, %s21
        %s279 = smul.u32 2, %s21
        %v281 = vld [vmem:[%s1] sm:$0xf]
        %v282 = vld [vmem:[%s1 + $0x4] sm:$0xf]
        %v283 = vld [vmem:[%s1 + $0x8] sm:$0xf]
        %v284 = vld [vmem:[%s1 + $0xc] sm:$0xf]
        %v285 = vld [vmem:[%s2] sm:$0xff]
        %v286 = vld [vmem:[%s2 + $0x8] sm:$0xff]
        %v287 = vld [vmem:[%s2 + $0x10] sm:$0xff]
        %v288 = vld [vmem:[%s2 + $0x18] sm:$0xff]
        %v289 = vld [vmem:[%s3] sm:$0xf]
        %v290 = vld [vmem:[%s3 + $0x4] sm:$0xf]
        %v291 = vld [vmem:[%s3 + $0x8] sm:$0xf]
        %v292 = vld [vmem:[%s3 + $0xc] sm:$0xf]
        %v293 = vld [vmem:[%s3 + $0x10] sm:$0xf]
        %v294 = vld [vmem:[%s3 + $0x14] sm:$0xf]
        %v295 = vld [vmem:[%s3 + $0x18] sm:$0xf]
        %v296 = vld [vmem:[%s3 + $0x1c] sm:$0xf]
        %v297 = vld [vmem:[%s4] sm:$0xff]
        %v298 = vld [vmem:[%s4 + $0x8] sm:$0xff]
        %v299 = vld [vmem:[%s4 + $0x10] sm:$0xff]
        %v300 = vld [vmem:[%s4 + $0x18] sm:$0xff]
        %v301 = vld [vmem:[%s4 + $0x20] sm:$0xff]
        %v302 = vld [vmem:[%s4 + $0x28] sm:$0xff]
        %v303 = vld [vmem:[%s4 + $0x30] sm:$0xff]
        %v304 = vld [vmem:[%s4 + $0x38] sm:$0xff]
        %v305 = vld [vmem:[%s5] sm:$0x7]
        %v306 = vld [vmem:[%s6] sm:$0x3f]
        %v307 = vld [vmem:[%s277] sm:$0xf]
        %309 = vset.pattern.permute.xlu0 0
        %310 = vperm.xlu0 %309, %v285
        %v311 = vpop.permute.xlu0 %310
        %314 = vset.pattern.permute.xlu0 0
        %315 = vperm.xlu0 %314, %v286
        %v316 = vpop.permute.xlu0 %315
        %319 = vset.pattern.permute.xlu0 0
        %320 = vperm.xlu0 %319, %v287
        %v321 = vpop.permute.xlu0 %320
        %324 = vset.pattern.permute.xlu0 0
        %325 = vperm.xlu0 %324, %v288
        %v326 = vpop.permute.xlu0 %325
        %v332 = vunpack.c.l.b16 %v281
        %v333 = vunpack.c.l.b16 %v282
        %v334 = vunpack.c.l.b16 %v283
        %v335 = vunpack.c.l.b16 %v284
        %v336 = vpack.c.b16 %v333, %v332
        %v337 = vpack.c.b16 %v335, %v334
        %v340 = vunpack.c.l.s4 1983009808
        %v341 = vunpack.c.0.s8 %v340
        %v342 = vlaneseq
        %v343 = vshrl.u32 %v342, 7
        %v344 = vsub.s32 %v341, %v343
        %v345 = vrot.slane %v307, %v344
        %v346 = vcombine.high %v345, %v345
        %vm347 = vcmask 31744
        %v349 = vsel %vm347, %v336, 0
        %v352 = vsel %vm347, %v337, 0
        %vm354 = vcmask 1041408
        %v356 = vsel %vm354, %v345, 0
        %v359 = vsel %vm354, %v346, 0
        %361 = vmatprep.subr.bf16.mxu0 %v359
        %362 = vmatpush1.bf16.msra.mxu0 %v356
        %363 = vmatprep.subr.bf16.mxu0 0
        %364 = vmatpush1.bf16.msra.mxu0 0
        %365 = vmatprep.subr.bf16.mxu0 0
        %366 = vmatpush1.bf16.msra.mxu0 0
        %367 = vmatprep.subr.bf16.mxu0 0
        %368 = vmatpush1.bf16.msra.mxu0 0
        %369 = vmatprep.subr.bf16.mxu0 0
        %370 = vmatpush1.bf16.msra.mxu0 0
        %371 = vmatprep.subr.bf16.mxu0 0
        %372 = vmatpush1.bf16.msra.mxu0 0
        %373 = vmatprep.subr.bf16.mxu0 0
        %374 = vmatpush1.bf16.msra.mxu0 0
        %375 = vmatprep.subr.bf16.mxu0 0
        %376 = vmatpush1.bf16.msra.mxu0 0
        %377 = vmatprep.subr.bf16.mxu0 0
        %378 = vmatpush1.bf16.msra.mxu0 0
        %379 = vmatprep.subr.bf16.mxu0 0
        %380 = vmatpush1.bf16.msra.mxu0 0
        %381 = vmatprep.subr.bf16.mxu0 0
        %382 = vmatpush1.bf16.msra.mxu0 0
        %383 = vmatprep.subr.bf16.mxu0 0
        %384 = vmatpush1.bf16.msra.mxu0 0
        %385 = vmatprep.subr.bf16.mxu0 0
        %386 = vmatpush1.bf16.msra.mxu0 0
        %387 = vmatprep.subr.bf16.mxu0 0
        %388 = vmatpush1.bf16.msra.mxu0 0
        %389 = vmatprep.subr.bf16.mxu0 0
        %390 = vmatpush1.bf16.msra.mxu0 0
        %391 = vmatprep.subr.bf16.mxu0 0
        %392 = vmatpush1.bf16.msra.mxu0 0
        %393 = vmatprep.mubr.bf16.mxu0 0
        %394 = vmatmul.mubr.bf16.gmra.mrb[0].mxu0 %v349
        %v395 = vpop.f32.mrb[0].mxu0
        %v396 = vadd.f32 %v311, %v395
        %v397 = vpop.f32.mrb[0].mxu0
        %v398 = vadd.f32 %v311, %v397
        %v399 = vpop.f32.mrb[0].mxu0
        %v400 = vadd.f32 %v316, %v399
        %v401 = vpop.f32.mrb[0].mxu0
        %v402 = vadd.f32 %v316, %v401
        %403 = vmatprep.mubr.bf16.mxu0 0
        %404 = vmatmul.mubr.bf16.gmra.mrb[0].mxu0 %v352
        %v405 = vpop.f32.mrb[0].mxu0
        %v406 = vadd.f32 %v321, %v405
        %v407 = vpop.f32.mrb[0].mxu0
        %v408 = vadd.f32 %v321, %v407
        %v409 = vpop.f32.mrb[0].mxu0
        %v410 = vadd.f32 %v326, %v409
        %v411 = vpop.f32.mrb[0].mxu0
        %v412 = vadd.f32 %v326, %v411
        %413 = vdwg.mxu0
        %v414 = vmax.f32 %v396, 0.0
        %v415 = vmax.f32 %v398, 0.0
        %v416 = vmax.f32 %v400, 0.0
        %v417 = vmax.f32 %v402, 0.0
        %v418 = vmax.f32 %v406, 0.0
        %v419 = vmax.f32 %v408, 0.0
        %v420 = vmax.f32 %v410, 0.0
        %v421 = vmax.f32 %v412, 0.0
        %v422 = vpack.c.bf16 %v416, %v414
        %v423 = vpack.c.bf16 %v417, %v415
        %v424 = vpack.c.bf16 %v420, %v418
        %v425 = vpack.c.bf16 %v421, %v419
        %427 = vset.pattern.permute.xlu0 0
        %428 = vperm.xlu0 %427, %v297
        %v429 = vpop.permute.xlu0 %428
        %432 = vset.pattern.permute.xlu0 0
        %433 = vperm.xlu0 %432, %v298
        %v434 = vpop.permute.xlu0 %433
        %437 = vset.pattern.permute.xlu0 0
        %438 = vperm.xlu0 %437, %v299
        %v439 = vpop.permute.xlu0 %438
        %442 = vset.pattern.permute.xlu0 0
        %443 = vperm.xlu0 %442, %v300
        %v444 = vpop.permute.xlu0 %443
        %447 = vset.pattern.permute.xlu0 0
        %448 = vperm.xlu0 %447, %v301
        %v449 = vpop.permute.xlu0 %448
        %452 = vset.pattern.permute.xlu0 0
        %453 = vperm.xlu0 %452, %v302
        %v454 = vpop.permute.xlu0 %453
        %457 = vset.pattern.permute.xlu0 0
        %458 = vperm.xlu0 %457, %v303
        %v459 = vpop.permute.xlu0 %458
        %462 = vset.pattern.permute.xlu0 0
        %463 = vperm.xlu0 %462, %v304
        %v464 = vpop.permute.xlu0 %463
        %v474 = vunpack.c.l.b16 %v289
        %v475 = vunpack.c.l.b16 %v290
        %v476 = vunpack.c.l.b16 %v291
        %v477 = vunpack.c.l.b16 %v292
        %v478 = vunpack.c.l.b16 %v293
        %v479 = vunpack.c.l.b16 %v294
        %v480 = vunpack.c.l.b16 %v295
        %v481 = vunpack.c.l.b16 %v296
        %v482 = vpack.c.b16 %v475, %v474
        %v483 = vpack.c.b16 %v477, %v476
        %v484 = vpack.c.b16 %v479, %v478
        %v485 = vpack.c.b16 %v481, %v480
        %vm486 = vcmask 261120
        %v488 = vsel %vm486, %v482, 0
        %v491 = vsel %vm486, %v483, 0
        %v494 = vsel %vm486, %v484, 0
        %v497 = vsel %vm486, %v485, 0
        %499 = vmatprep.subr.bf16.mxu0 %v423
        %500 = vmatpush1.bf16.msra.mxu0 %v422
        %501 = vmatprep.subr.bf16.mxu0 %v425
        %502 = vmatpush1.bf16.msra.mxu0 %v424
        %503 = vmatprep.subr.bf16.mxu0 0
        %504 = vmatpush1.bf16.msra.mxu0 0
        %505 = vmatprep.subr.bf16.mxu0 0
        %506 = vmatpush1.bf16.msra.mxu0 0
        %507 = vmatprep.subr.bf16.mxu0 0
        %508 = vmatpush1.bf16.msra.mxu0 0
        %509 = vmatprep.subr.bf16.mxu0 0
        %510 = vmatpush1.bf16.msra.mxu0 0
        %511 = vmatprep.subr.bf16.mxu0 0
        %512 = vmatpush1.bf16.msra.mxu0 0
        %513 = vmatprep.subr.bf16.mxu0 0
        %514 = vmatpush1.bf16.msra.mxu0 0
        %515 = vmatprep.subr.bf16.mxu0 0
        %516 = vmatpush1.bf16.msra.mxu0 0
        %517 = vmatprep.subr.bf16.mxu0 0
        %518 = vmatpush1.bf16.msra.mxu0 0
        %519 = vmatprep.subr.bf16.mxu0 0
        %520 = vmatpush1.bf16.msra.mxu0 0
        %521 = vmatprep.subr.bf16.mxu0 0
        %522 = vmatpush1.bf16.msra.mxu0 0
        %523 = vmatprep.subr.bf16.mxu0 0
        %524 = vmatpush1.bf16.msra.mxu0 0
        %525 = vmatprep.subr.bf16.mxu0 0
        %526 = vmatpush1.bf16.msra.mxu0 0
        %527 = vmatprep.subr.bf16.mxu0 0
        %528 = vmatpush1.bf16.msra.mxu0 0
        %529 = vmatprep.subr.bf16.mxu0 0
        %530 = vmatpush1.bf16.msra.mxu0 0
        %531 = vmatprep.mubr.bf16.mxu0 0
        %532 = vmatmul.mubr.bf16.gmra.mrb[0].mxu0 %v488
        %v533 = vpop.f32.mrb[0].mxu0
        %v534 = vadd.f32 %v429, %v533
        %v535 = vpop.f32.mrb[0].mxu0
        %v536 = vadd.f32 %v429, %v535
        %v537 = vpop.f32.mrb[0].mxu0
        %v538 = vadd.f32 %v434, %v537
        %v539 = vpop.f32.mrb[0].mxu0
        %v540 = vadd.f32 %v434, %v539
        %541 = vmatprep.mubr.bf16.mxu0 0
        %542 = vmatmul.mubr.bf16.gmra.mrb[0].mxu0 %v491
        %v543 = vpop.f32.mrb[0].mxu0
        %v544 = vadd.f32 %v439, %v543
        %v545 = vpop.f32.mrb[0].mxu0
        %v546 = vadd.f32 %v439, %v545
        %v547 = vpop.f32.mrb[0].mxu0
        %v548 = vadd.f32 %v444, %v547
        %v549 = vpop.f32.mrb[0].mxu0
        %v550 = vadd.f32 %v444, %v549
        %551 = vmatprep.mubr.bf16.mxu0 0
        %552 = vmatmul.mubr.bf16.gmra.mrb[0].mxu0 %v494
        %v553 = vpop.f32.mrb[0].mxu0
        %v554 = vadd.f32 %v449, %v553
        %v555 = vpop.f32.mrb[0].mxu0
        %v556 = vadd.f32 %v449, %v555
        %v557 = vpop.f32.mrb[0].mxu0
        %v558 = vadd.f32 %v454, %v557
        %v559 = vpop.f32.mrb[0].mxu0
        %v560 = vadd.f32 %v454, %v559
        %561 = vmatprep.mubr.bf16.mxu0 0
        %562 = vmatmul.mubr.bf16.gmra.mrb[0].mxu0 %v497
        %v563 = vpop.f32.mrb[0].mxu0
        %v564 = vadd.f32 %v459, %v563
        %v565 = vpop.f32.mrb[0].mxu0
        %v566 = vadd.f32 %v459, %v565
        %v567 = vpop.f32.mrb[0].mxu0
        %v568 = vadd.f32 %v464, %v567
        %v569 = vpop.f32.mrb[0].mxu0
        %v570 = vadd.f32 %v464, %v569
        %571 = vdwg.mxu0
        %v572 = vmax.f32 %v534, 0.0
        %v573 = vmax.f32 %v536, 0.0
        %v574 = vmax.f32 %v538, 0.0
        %v575 = vmax.f32 %v540, 0.0
        %v576 = vmax.f32 %v544, 0.0
        %v577 = vmax.f32 %v546, 0.0
        %v578 = vmax.f32 %v548, 0.0
        %v579 = vmax.f32 %v550, 0.0
        %v580 = vmax.f32 %v554, 0.0
        %v581 = vmax.f32 %v556, 0.0
        %v582 = vmax.f32 %v558, 0.0
        %v583 = vmax.f32 %v560, 0.0
        %v584 = vmax.f32 %v564, 0.0
        %v585 = vmax.f32 %v566, 0.0
        %v586 = vmax.f32 %v568, 0.0
        %v587 = vmax.f32 %v570, 0.0
        %v588 = vpack.c.bf16 %v574, %v572
        %v589 = vpack.c.bf16 %v575, %v573
        %v590 = vpack.c.bf16 %v578, %v576
        %v591 = vpack.c.bf16 %v579, %v577
        %v592 = vpack.c.bf16 %v582, %v580
        %v593 = vpack.c.bf16 %v583, %v581
        %v594 = vpack.c.bf16 %v586, %v584
        %v595 = vpack.c.bf16 %v587, %v585
        %597 = vset.pattern.permute.xlu0 0
        %598 = vperm.xlu0 %597, %v306
        %v599 = vpop.permute.xlu0 %598
        %vm601 = vcmask 523264
        %v603 = vsel %vm601, %v305, 0
        %605 = vmatprep.subr.bf16.mxu0 %v589
        %606 = vmatpush1.bf16.msra.mxu0 %v588
        %607 = vmatprep.subr.bf16.mxu0 %v591
        %608 = vmatpush1.bf16.msra.mxu0 %v590
        %609 = vmatprep.subr.bf16.mxu0 %v593
        %610 = vmatpush1.bf16.msra.mxu0 %v592
        %611 = vmatprep.subr.bf16.mxu0 %v595
        %612 = vmatpush1.bf16.msra.mxu0 %v594
        %613 = vmatprep.subr.bf16.mxu0 0
        %614 = vmatpush1.bf16.msra.mxu0 0
        %615 = vmatprep.subr.bf16.mxu0 0
        %616 = vmatpush1.bf16.msra.mxu0 0
        %617 = vmatprep.subr.bf16.mxu0 0
        %618 = vmatpush1.bf16.msra.mxu0 0
        %619 = vmatprep.subr.bf16.mxu0 0
        %620 = vmatpush1.bf16.msra.mxu0 0
        %621 = vmatprep.subr.bf16.mxu0 0
        %622 = vmatpush1.bf16.msra.mxu0 0
        %623 = vmatprep.subr.bf16.mxu0 0
        %624 = vmatpush1.bf16.msra.mxu0 0
        %625 = vmatprep.subr.bf16.mxu0 0
        %626 = vmatpush1.bf16.msra.mxu0 0
        %627 = vmatprep.subr.bf16.mxu0 0
        %628 = vmatpush1.bf16.msra.mxu0 0
        %629 = vmatprep.subr.bf16.mxu0 0
        %630 = vmatpush1.bf16.msra.mxu0 0
        %631 = vmatprep.subr.bf16.mxu0 0
        %632 = vmatpush1.bf16.msra.mxu0 0
        %633 = vmatprep.subr.bf16.mxu0 0
        %634 = vmatpush1.bf16.msra.mxu0 0
        %635 = vmatprep.subr.bf16.mxu0 0
        %636 = vmatpush1.bf16.msra.mxu0 0
        %637 = vmatprep.mubr.bf16.mxu0 0
        %638 = vmatmul.mubr.bf16.gmra.mrb[0].mxu0 %v603
        %v639 = vpop.f32.mrb[0].mxu0
        %v640 = vadd.f32 %v599, %v639
        %v641 = vpop.f32.mrb[0].mxu0
        %v642 = vadd.f32 %v599, %v641
        %v643 = vpop.f32.mrb[0].mxu0
        %v644 = vpop.f32.mrb[0].mxu0
        %645 = vdwg.mxu0
        %v646 = vsub.f32 0.0, %v640
        %v647 = vsub.f32 0.0, %v642
        %v648 = vmul.f32 %v646, 1.442695
        %v649 = vpow.pop %v648
        %v650 = vmul.f32 %v647, 1.442695
        %v651 = vpow.pop %v650
        %v652 = vadd.f32 %v649, 1.0
        %v653 = vadd.f32 %v651, 1.0
        %v654 = vrcp.pop %v652
        %v655 = vrcp.pop %v653
        %656 = vst [vmem:[%s272] sm:$0x3f] %v654
        %657 = vst [vmem:[%s272 + $0x8] sm:$0x3f] %v655
        %s658 = sand.u32 %s181, 1
        %s659 = scalar_lea.sflag [#allocation3], %s658
        %s660 = sand.u32 %s181, 1
        %s661 = smul.addr %s660, 16
        %s662 = scalar_lea.vmem [#allocation2], %s661
        // Predicated region
        $region49: #{tpu_custom_call.1} parent=47 // pred_check
          %p663 = pneg %p191
        $region50: #{tpu_custom_call.1} parent=47 // pred_check_branch
          %665 = sbr.rel (%p663) target = $region52
        $region51: #{tpu_custom_call.1} parent=47 // pred_region
          %s666 = smul.u32 2, %s21
          %s668 = ssub.s32 256, 256
          %669 = vsyncadd %s659, %s668
          %s670 = smul.addr %s666, 128
          %s671 = scalar_lea.hbm %s7, %s670
          %s673 = sshll.u32 %s662, 4
          %s674 = int_to_ptr.vmem [resolvable:$true] %s673
          %676 = dma.vmem_to_hbm [thread:$0]  %s674, 256, %s671, %s659
        $region52: #{tpu_custom_call.1} parent=47 // pred_fallthru
          _
      $region48: #{tpu_custom_call.1} parent=5 // pred_fallthru
        _
      %p677 = scmp.le.s32.totalorder 2, %s16
      // Predicated region
      $region53: #{tpu_custom_call.1} parent=5 // pred_check
        %p678 = pneg %p677
      $region54: #{tpu_custom_call.1} parent=5 // pred_check_branch
        %680 = sbr.rel (%p678) target = $region56
      $region55: #{tpu_custom_call.1} parent=5 // pred_region
        %s681 = ssub.s32 %s16, 2
        // Predicated region
        $region57: #{tpu_custom_call.1} parent=55 // pred_check
          %p682 = pneg %p197
        $region58: #{tpu_custom_call.1} parent=55 // pred_check_branch
          %684 = sbr.rel (%p682) target = $region60
        $region59: #{tpu_custom_call.1} parent=55 // pred_region
          %s685 = sand.u32 %s182, 1
          %s686 = scalar_lea.sflag [#allocation3], %s685
          %s687 = sand.u32 %s182, 1
          %s688 = smul.addr %s687, 16
          %s689 = scalar_lea.vmem [#allocation2], %s688
          %690 = dma.done %s686, 256
        $region60: #{tpu_custom_call.1} parent=55 // pred_fallthru
          _
      $region56: #{tpu_custom_call.1} parent=5 // pred_fallthru
        _
    $region6: #{tpu_custom_call.1} parent=1 // loop_footer
      %s20 = sadd.s32 1, %s16
    $region7: #{tpu_custom_call.1} parent=1 // loop_footer_branch
      %15 = sbr.rel target = $region3
    $region8: #{tpu_custom_call.1} parent=1 // loop_exit
      _
    %691 = vsyncpa [#allocation3], 1
    %s692 = scalar_lea.sflag [#allocation3], 1
    %693 = vsyncpa %s692, 1

</llo_original>
